<compile_context>
chip_gen: v5e
topology: v5e:2x2
jax: 0.10.0
libtpu: 0.0.40
codegen_flags: <defaults>
</compile_context>

<pallas_src>
import functools

import jax
import jax.numpy as jnp
from jax import lax
from jax.experimental import pallas as pl
from jax.experimental.pallas import tpu as pltpu


def _block_kernel(x_ref, w1_ref, b1_ref, w2_ref, b2_ref, o_ref, *, H, W):
    # x_ref : (Cin, H*W)      one image, row-major flattened NCHW pixels
    # w1_ref: (Cout, 9*Cin)   K ordered as (dy, dx, c)
    # b1_ref: (Cout, 1)
    # w2_ref: (Cout, 9*Cout)  K ordered as (dy, dx, c)
    # b2_ref: (Cout, 1)
    # o_ref : (Cout, H2*W2)   lane-dense flattened valid output for this image
    H2, W2 = H - 4, W - 4

    # "Wide" output lengths: outputs are indexed by q = i*W + j (stride W, the
    # same as the input grid).  Columns j beyond the valid width are junk
    # produced by row wrap-around; they stay finite (ReLU'd activations) and
    # are never read back for any valid output position.
    Q1 = (H - 3) * W + (W - 2)   # conv1 wide-output length (ends exactly at H*W - 2W - 2 taps)
    Q2 = (H - 5) * W + (W - 4)   # conv2 wide-output length

    # ---- conv1: single im2col matmul, K = 9*Cin ----
    # Tap (dy, dx) of the 3x3 kernel is a static lane shift by dy*W + dx of
    # the flattened image, so the im2col matrix needs no 2-D slice/reshape.
    cols1 = jnp.concatenate(
        [x_ref[:, dy * W + dx: dy * W + dx + Q1]
         for dy in range(3) for dx in range(3)],
        axis=0).astype(jnp.float32)                       # (9*Cin, Q1)
    h = jnp.dot(w1_ref[...].astype(jnp.float32), cols1,
                preferred_element_type=jnp.float32)       # (Cout, Q1)
    h = jnp.maximum(h + b1_ref[...], 0.0)                 # bias + ReLU fused

    # ---- conv2: single im2col matmul, K = 9*Cout ----
    cols2 = jnp.concatenate(
        [h[:, dy * W + dx: dy * W + dx + Q2]
         for dy in range(3) for dx in range(3)],
        axis=0)                                           # (9*Cout, Q2)
    out = jnp.dot(w2_ref[...].astype(jnp.float32), cols2,
                  preferred_element_type=jnp.float32)     # (Cout, Q2)
    out = (out + b2_ref[...]).astype(o_ref.dtype)

    # Compact the wide output (row stride W) into a contiguous lane-dense
    # (Cout, H2*W2) slab and write it with ONE store (output row i lives at
    # wide lanes [i*W, i*W + W2)).
    o_ref[...] = jnp.concatenate(
        [out[:, i * W: i * W + W2] for i in range(H2)], axis=1)


def block_forward(x_nchw, w1_oihw, b1, w2_oihw, b2):
    """PyTorch-semantics forward: (N, Cin, H, W) -> (N, Cout, H-4, W-4)."""
    N, Cin, H, W = x_nchw.shape
    Cout = w1_oihw.shape[0]
    assert H >= 5 and W >= 5, "two valid 3x3 convs need H, W >= 5"
    H2, W2 = H - 4, W - 4

    # Row-major flatten of the pixel grid: metadata-only in HBM (no copy).
    x_flat = x_nchw.reshape(N, Cin, H * W)

    # One-time tiny weight repack: OIHW -> (O, 9*I), K ordered as (dy, dx, c).
    w1_mat = jnp.transpose(w1_oihw, (0, 2, 3, 1)).reshape(Cout, 9 * Cin)
    w2_mat = jnp.transpose(w2_oihw, (0, 2, 3, 1)).reshape(Cout, 9 * Cout)
    b1_col = b1.reshape(Cout, 1)
    b2_col = b2.reshape(Cout, 1)

    out_flat = pl.pallas_call(
        functools.partial(_block_kernel, H=H, W=W),
        out_shape=jax.ShapeDtypeStruct((N, Cout, H2 * W2), x_nchw.dtype),
        grid=(N,),
        in_specs=[
            pl.BlockSpec((None, Cin, H * W), lambda b: (b, 0, 0)),
            pl.BlockSpec((Cout, 9 * Cin), lambda b: (0, 0)),
            pl.BlockSpec((Cout, 1), lambda b: (0, 0)),
            pl.BlockSpec((Cout, 9 * Cout), lambda b: (0, 0)),
            pl.BlockSpec((Cout, 1), lambda b: (0, 0)),
        ],
        out_specs=pl.BlockSpec((None, Cout, H2 * W2), lambda b: (b, 0, 0)),
        compiler_params=pltpu.CompilerParams(
            dimension_semantics=("parallel",)),
    )(x_flat, w1_mat, b1_col, w2_mat, b2_col)

    # Metadata-only reshape back to NCHW.
    return out_flat.reshape(N, Cout, H2, W2)


def _reference_forward(x_nchw, w1_oihw, b1, w2_oihw, b2):
    """Pure-JAX reference (lax conv) for correctness check."""
    dn = ("NCHW", "OIHW", "NCHW")
    h = lax.conv_general_dilated(x_nchw, w1_oihw, (1, 1), "VALID",
                                 dimension_numbers=dn)
    h = jnp.maximum(h + b1[None, :, None, None], 0.0)
    o = lax.conv_general_dilated(h, w2_oihw, (1, 1), "VALID",
                                 dimension_numbers=dn)
    return o + b2[None, :, None, None]


if __name__ == "__main__":
    # Small shapes consistent with the module: Block(inChannels=4, outChannels=8)
    N, Cin, Cout, H, W = 2, 4, 8, 16, 16

    key = jax.random.PRNGKey(0)
    kx, k1w, k1b, k2w, k2b = jax.random.split(key, 5)

    x = jax.random.normal(kx, (N, Cin, H, W), dtype=jnp.float32)

    # PyTorch Conv2d parameter shapes: OIHW weights, (O,) bias.
    fan1 = Cin * 3 * 3
    fan2 = Cout * 3 * 3
    w1 = jax.random.uniform(k1w, (Cout, Cin, 3, 3), jnp.float32,
                            -1.0 / jnp.sqrt(fan1), 1.0 / jnp.sqrt(fan1))
    b1 = jax.random.uniform(k1b, (Cout,), jnp.float32,
                            -1.0 / jnp.sqrt(fan1), 1.0 / jnp.sqrt(fan1))
    w2 = jax.random.uniform(k2w, (Cout, Cout, 3, 3), jnp.float32,
                            -1.0 / jnp.sqrt(fan2), 1.0 / jnp.sqrt(fan2))
    b2 = jax.random.uniform(k2b, (Cout,), jnp.float32,
                            -1.0 / jnp.sqrt(fan2), 1.0 / jnp.sqrt(fan2))

    out = jax.block_until_ready(block_forward(x, w1, b1, w2, b2))
    ref = jax.block_until_ready(_reference_forward(x, w1, b1, w2, b2))

    assert out.shape == (N, Cout, H - 4, W - 4), out.shape
    assert jnp.allclose(out, ref, atol=1e-4, rtol=1e-4), \
        float(jnp.max(jnp.abs(out - ref)))

    print("KERNEL_OK")
</pallas_src>

<mosaic_0001>
module attributes {stable_mosaic.version = 11 : i64} {
  func.func @_block_kernel(%arg0: i32, %arg1: memref<1x4x256xf32, #tpu.memory_space<vmem>>, %arg2: memref<8x36xf32, #tpu.memory_space<vmem>>, %arg3: memref<8x1xf32, #tpu.memory_space<vmem>>, %arg4: memref<8x72xf32, #tpu.memory_space<vmem>>, %arg5: memref<8x1xf32, #tpu.memory_space<vmem>>, %arg6: memref<1x8x144xf32, #tpu.memory_space<vmem>>) attributes {dimension_semantics = [#tpu.dimension_semantics<parallel>], iteration_bounds = array<i64: 2>, scalar_prefetch = 0 : i64, scratch_operands = 0 : i64, tpu.core_type = #tpu.core_type<tc>, window_params = [{transform_indices = @transform_0, window_bounds = array<i64: 1, 4, 256>}, {pipeline_mode = #tpu.pipeline_mode<synchronous>, transform_indices = @transform_1, window_bounds = array<i64: 8, 36>}, {pipeline_mode = #tpu.pipeline_mode<synchronous>, transform_indices = @transform_2, window_bounds = array<i64: 8, 1>}, {pipeline_mode = #tpu.pipeline_mode<synchronous>, transform_indices = @transform_3, window_bounds = array<i64: 8, 72>}, {pipeline_mode = #tpu.pipeline_mode<synchronous>, transform_indices = @transform_4, window_bounds = array<i64: 8, 1>}, {transform_indices = @transform_5, window_bounds = array<i64: 1, 8, 144>}]} {
    %c0 = arith.constant 0 : index
    %c0_0 = arith.constant 0 : index
    %c0_1 = arith.constant 0 : index
    %0 = vector.load %arg1[%c0, %c0_0, %c0_1] : memref<1x4x256xf32, #tpu.memory_space<vmem>>, vector<1x4x222xf32>
    %1 = vector.shape_cast %0 : vector<1x4x222xf32> to vector<4x222xf32>
    %c0_2 = arith.constant 0 : index
    %c0_3 = arith.constant 0 : index
    %c1 = arith.constant 1 : index
    %2 = vector.load %arg1[%c0_2, %c0_3, %c1] : memref<1x4x256xf32, #tpu.memory_space<vmem>>, vector<1x4x222xf32>
    %3 = vector.shape_cast %2 : vector<1x4x222xf32> to vector<4x222xf32>
    %c0_4 = arith.constant 0 : index
    %c0_5 = arith.constant 0 : index
    %c2 = arith.constant 2 : index
    %4 = vector.load %arg1[%c0_4, %c0_5, %c2] : memref<1x4x256xf32, #tpu.memory_space<vmem>>, vector<1x4x222xf32>
    %5 = vector.shape_cast %4 : vector<1x4x222xf32> to vector<4x222xf32>
    %c0_6 = arith.constant 0 : index
    %c0_7 = arith.constant 0 : index
    %c16 = arith.constant 16 : index
    %6 = vector.load %arg1[%c0_6, %c0_7, %c16] : memref<1x4x256xf32, #tpu.memory_space<vmem>>, vector<1x4x222xf32>
    %7 = vector.shape_cast %6 : vector<1x4x222xf32> to vector<4x222xf32>
    %c0_8 = arith.constant 0 : index
    %c0_9 = arith.constant 0 : index
    %c17 = arith.constant 17 : index
    %8 = vector.load %arg1[%c0_8, %c0_9, %c17] : memref<1x4x256xf32, #tpu.memory_space<vmem>>, vector<1x4x222xf32>
    %9 = vector.shape_cast %8 : vector<1x4x222xf32> to vector<4x222xf32>
    %c0_10 = arith.constant 0 : index
    %c0_11 = arith.constant 0 : index
    %c18 = arith.constant 18 : index
    %10 = vector.load %arg1[%c0_10, %c0_11, %c18] : memref<1x4x256xf32, #tpu.memory_space<vmem>>, vector<1x4x222xf32>
    %11 = vector.shape_cast %10 : vector<1x4x222xf32> to vector<4x222xf32>
    %c0_12 = arith.constant 0 : index
    %c0_13 = arith.constant 0 : index
    %c32 = arith.constant 32 : index
    %12 = vector.load %arg1[%c0_12, %c0_13, %c32] : memref<1x4x256xf32, #tpu.memory_space<vmem>>, vector<1x4x222xf32>
    %13 = vector.shape_cast %12 : vector<1x4x222xf32> to vector<4x222xf32>
    %c0_14 = arith.constant 0 : index
    %c0_15 = arith.constant 0 : index
    %c33 = arith.constant 33 : index
    %14 = vector.load %arg1[%c0_14, %c0_15, %c33] : memref<1x4x256xf32, #tpu.memory_space<vmem>>, vector<1x4x222xf32>
    %15 = vector.shape_cast %14 : vector<1x4x222xf32> to vector<4x222xf32>
    %c0_16 = arith.constant 0 : index
    %c0_17 = arith.constant 0 : index
    %c34 = arith.constant 34 : index
    %16 = vector.load %arg1[%c0_16, %c0_17, %c34] : memref<1x4x256xf32, #tpu.memory_space<vmem>>, vector<1x4x222xf32>
    %17 = vector.shape_cast %16 : vector<1x4x222xf32> to vector<4x222xf32>
    %18 = tpu.concatenate %1, %3, %5, %7, %9, %11, %13, %15, %17 in 0 : vector<4x222xf32>, vector<4x222xf32>, vector<4x222xf32>, vector<4x222xf32>, vector<4x222xf32>, vector<4x222xf32>, vector<4x222xf32>, vector<4x222xf32>, vector<4x222xf32> -> vector<36x222xf32>
    %c0_18 = arith.constant 0 : index
    %c0_19 = arith.constant 0 : index
    %19 = vector.load %arg2[%c0_18, %c0_19] : memref<8x36xf32, #tpu.memory_space<vmem>>, vector<8x36xf32>
    %cst = arith.constant dense<0.000000e+00> : vector<8x222xf32>
    %20 = tpu.matmul %19, %18, %cst {dimension_numbers = #tpu.dot_dimension_numbers<[1], [0], [0], [1], [0, 0, 1, 1], [], []>} : vector<8x36xf32>, vector<36x222xf32>, vector<8x222xf32> -> vector<8x222xf32>
    %c0_20 = arith.constant 0 : index
    %c0_21 = arith.constant 0 : index
    %21 = vector.load %arg3[%c0_20, %c0_21] : memref<8x1xf32, #tpu.memory_space<vmem>>, vector<8x1xf32>
    %22 = vector.broadcast %21 : vector<8x1xf32> to vector<8x222xf32>
    %23 = arith.addf %20, %22 : vector<8x222xf32>
    %cst_22 = arith.constant 0.000000e+00 : f32
    %24 = vector.broadcast %cst_22 : f32 to vector<8x222xf32>
    %25 = arith.maximumf %23, %24 : vector<8x222xf32>
    %26 = vector.extract_strided_slice %25 {offsets = [0, 0], sizes = [8, 188], strides = [1, 1]} : vector<8x222xf32> to vector<8x188xf32>
    %27 = vector.extract_strided_slice %25 {offsets = [0, 1], sizes = [8, 188], strides = [1, 1]} : vector<8x222xf32> to vector<8x188xf32>
    %28 = vector.extract_strided_slice %25 {offsets = [0, 2], sizes = [8, 188], strides = [1, 1]} : vector<8x222xf32> to vector<8x188xf32>
    %29 = vector.extract_strided_slice %25 {offsets = [0, 16], sizes = [8, 188], strides = [1, 1]} : vector<8x222xf32> to vector<8x188xf32>
    %30 = vector.extract_strided_slice %25 {offsets = [0, 17], sizes = [8, 188], strides = [1, 1]} : vector<8x222xf32> to vector<8x188xf32>
    %31 = vector.extract_strided_slice %25 {offsets = [0, 18], sizes = [8, 188], strides = [1, 1]} : vector<8x222xf32> to vector<8x188xf32>
    %32 = vector.extract_strided_slice %25 {offsets = [0, 32], sizes = [8, 188], strides = [1, 1]} : vector<8x222xf32> to vector<8x188xf32>
    %33 = vector.extract_strided_slice %25 {offsets = [0, 33], sizes = [8, 188], strides = [1, 1]} : vector<8x222xf32> to vector<8x188xf32>
    %34 = vector.extract_strided_slice %25 {offsets = [0, 34], sizes = [8, 188], strides = [1, 1]} : vector<8x222xf32> to vector<8x188xf32>
    %35 = tpu.concatenate %26, %27, %28, %29, %30, %31, %32, %33, %34 in 0 : vector<8x188xf32>, vector<8x188xf32>, vector<8x188xf32>, vector<8x188xf32>, vector<8x188xf32>, vector<8x188xf32>, vector<8x188xf32>, vector<8x188xf32>, vector<8x188xf32> -> vector<72x188xf32>
    %c0_23 = arith.constant 0 : index
    %c0_24 = arith.constant 0 : index
    %36 = vector.load %arg4[%c0_23, %c0_24] : memref<8x72xf32, #tpu.memory_space<vmem>>, vector<8x72xf32>
    %cst_25 = arith.constant dense<0.000000e+00> : vector<8x188xf32>
    %37 = tpu.matmul %36, %35, %cst_25 {dimension_numbers = #tpu.dot_dimension_numbers<[1], [0], [0], [1], [0, 0, 1, 1], [], []>} : vector<8x72xf32>, vector<72x188xf32>, vector<8x188xf32> -> vector<8x188xf32>
    %c0_26 = arith.constant 0 : index
    %c0_27 = arith.constant 0 : index
    %38 = vector.load %arg5[%c0_26, %c0_27] : memref<8x1xf32, #tpu.memory_space<vmem>>, vector<8x1xf32>
    %39 = vector.broadcast %38 : vector<8x1xf32> to vector<8x188xf32>
    %40 = arith.addf %37, %39 : vector<8x188xf32>
    %41 = vector.extract_strided_slice %40 {offsets = [0, 0], sizes = [8, 12], strides = [1, 1]} : vector<8x188xf32> to vector<8x12xf32>
    %42 = vector.extract_strided_slice %40 {offsets = [0, 16], sizes = [8, 12], strides = [1, 1]} : vector<8x188xf32> to vector<8x12xf32>
    %43 = vector.extract_strided_slice %40 {offsets = [0, 32], sizes = [8, 12], strides = [1, 1]} : vector<8x188xf32> to vector<8x12xf32>
    %44 = vector.extract_strided_slice %40 {offsets = [0, 48], sizes = [8, 12], strides = [1, 1]} : vector<8x188xf32> to vector<8x12xf32>
    %45 = vector.extract_strided_slice %40 {offsets = [0, 64], sizes = [8, 12], strides = [1, 1]} : vector<8x188xf32> to vector<8x12xf32>
    %46 = vector.extract_strided_slice %40 {offsets = [0, 80], sizes = [8, 12], strides = [1, 1]} : vector<8x188xf32> to vector<8x12xf32>
    %47 = vector.extract_strided_slice %40 {offsets = [0, 96], sizes = [8, 12], strides = [1, 1]} : vector<8x188xf32> to vector<8x12xf32>
    %48 = vector.extract_strided_slice %40 {offsets = [0, 112], sizes = [8, 12], strides = [1, 1]} : vector<8x188xf32> to vector<8x12xf32>
    %49 = vector.extract_strided_slice %40 {offsets = [0, 128], sizes = [8, 12], strides = [1, 1]} : vector<8x188xf32> to vector<8x12xf32>
    %50 = vector.extract_strided_slice %40 {offsets = [0, 144], sizes = [8, 12], strides = [1, 1]} : vector<8x188xf32> to vector<8x12xf32>
    %51 = vector.extract_strided_slice %40 {offsets = [0, 160], sizes = [8, 12], strides = [1, 1]} : vector<8x188xf32> to vector<8x12xf32>
    %52 = vector.extract_strided_slice %40 {offsets = [0, 176], sizes = [8, 12], strides = [1, 1]} : vector<8x188xf32> to vector<8x12xf32>
    %53 = tpu.concatenate %41, %42, %43, %44, %45, %46, %47, %48, %49, %50, %51, %52 in 1 : vector<8x12xf32>, vector<8x12xf32>, vector<8x12xf32>, vector<8x12xf32>, vector<8x12xf32>, vector<8x12xf32>, vector<8x12xf32>, vector<8x12xf32>, vector<8x12xf32>, vector<8x12xf32>, vector<8x12xf32>, vector<8x12xf32> -> vector<8x144xf32>
    %c0_28 = arith.constant 0 : index
    %c0_29 = arith.constant 0 : index
    %c0_30 = arith.constant 0 : index
    %54 = vector.load %arg6[%c0_28, %c0_29, %c0_30] : memref<1x8x144xf32, #tpu.memory_space<vmem>>, vector<1x8x144xf32>
    %55 = vector.shape_cast %54 : vector<1x8x144xf32> to vector<8x144xf32>
    %56 = vector.shape_cast %53 : vector<8x144xf32> to vector<1x8x144xf32>
    tpu.vector_store %arg6[%c0_28, %c0_29, %c0_30], %56 {strides = array<i32>} : memref<1x8x144xf32, #tpu.memory_space<vmem>>, vector<1x8x144xf32>,
    return
  }
  func.func @transform_0(%arg0: i32) -> (i32, i32, i32) {
    %c0_i32 = arith.constant 0 : i32
    %c0_i32_0 = arith.constant 0 : i32
    %c0_i32_1 = arith.constant 0 : i32
    return %arg0, %c0_i32, %c0_i32_0 : i32, i32, i32
  }
  func.func @transform_1(%arg0: i32) -> (i32, i32) {
    %c0_i32 = arith.constant 0 : i32
    %c0_i32_0 = arith.constant 0 : i32
    %c0_i32_1 = arith.constant 0 : i32
    return %c0_i32, %c0_i32_0 : i32, i32
  }
  func.func @transform_2(%arg0: i32) -> (i32, i32) {
    %c0_i32 = arith.constant 0 : i32
    %c0_i32_0 = arith.constant 0 : i32
    %c0_i32_1 = arith.constant 0 : i32
    return %c0_i32, %c0_i32_0 : i32, i32
  }
  func.func @transform_3(%arg0: i32) -> (i32, i32) {
    %c0_i32 = arith.constant 0 : i32
    %c0_i32_0 = arith.constant 0 : i32
    %c0_i32_1 = arith.constant 0 : i32
    return %c0_i32, %c0_i32_0 : i32, i32
  }
  func.func @transform_4(%arg0: i32) -> (i32, i32) {
    %c0_i32 = arith.constant 0 : i32
    %c0_i32_0 = arith.constant 0 : i32
    %c0_i32_1 = arith.constant 0 : i32
    return %c0_i32, %c0_i32_0 : i32, i32
  }
  func.func @transform_5(%arg0: i32) -> (i32, i32, i32) {
    %c0_i32 = arith.constant 0 : i32
    %c0_i32_0 = arith.constant 0 : i32
    %c0_i32_1 = arith.constant 0 : i32
    return %arg0, %c0_i32, %c0_i32_0 : i32, i32, i32
  }
}

</mosaic_0001>

<llo_original>
// kernel: tpu_custom_call.1
$region0: #{tpu_custom_call.1}
  #allocation0 [shape = 'u32[]', space=smem, size = 0x4, offset = 0x4, fixed_abs, tag = 'smem constant byte address 0x4 - core index']
  #allocation1 [shape = 'u32[72,128]{1,0:T(1,128)}', space=vmem, size = 0x9000, scoped, tag = 'internal scratch']
  %s0 = inlined_call_operand.vmem [shape: f32[2,4,256], index: 0, kind: input, shape index: {}]
  %s1 = inlined_call_operand.hbm [shape: f32[8,36], index: 1, kind: input, shape index: {}]
  %s2 = inlined_call_operand.vmem [shape: f32[8,1], index: 2, kind: input, shape index: {}]
  %s3 = inlined_call_operand.hbm [shape: f32[8,72], index: 3, kind: input, shape index: {}]
  %s4 = inlined_call_operand.vmem [shape: f32[8,1], index: 4, kind: input, shape index: {}]
  %s5 = inlined_call_operand.hbm [shape: f32[2,8,144], index: 5, kind: output, shape index: {}]
  %s6 = sld [smem:[#allocation0]]
  $region61: #{tpu_custom_call.1} parent=0
    _
  %s8 = ssub.s32 1, %s6
  %s9 = scalar_select 0, %s8, %s6
  $region1: #{tpu_custom_call.1} parent=0
    #allocation2 [shape = 'u8[4096]{0}', space=vmem, size = 0x1000, scoped, tag = 'input window, operand 1, single buffered']
    #allocation3 [shape = 's32[2]{0}', space=sflag, size = 0x8, scoped, tag = 'scoped memory for tpu_custom_call.1']
    #allocation4 [shape = 's32[2]{0}', space=sflag, size = 0x8, scoped, tag = 'scoped memory for tpu_custom_call.1']
    #allocation5 [shape = 'u8[4096]{0}', space=vmem, size = 0x1000, scoped, tag = 'input window, operand 3, single buffered']
    #allocation6 [shape = 's32[1]{0}', space=sflag, size = 0x4, scoped, tag = 'scoped memory for tpu_custom_call.1']
    #allocation7 [shape = 'u8[16384]{0}', space=vmem, size = 0x4000, scoped, tag = 'output window, operand 0']
    %10 = vsyncpa [#allocation3], 0
    %11 = vsyncpa [#allocation6], 0
    %12 = vsyncpa [#allocation4], 0
    %s13 = scalar_lea.sflag [#allocation4], 1
    %14 = vsyncpa %s13, 0
    loop: start=0, step=1, limit=4
    $region2: #{tpu_custom_call.1} parent=1 // loop_pre_header
      _
    $region3: #{tpu_custom_call.1} parent=1 // loop_header
      %s16 = sphi 0, %s20
      %p17 = scmp.ge.s32.totalorder %s16, 4
      %s26 = sphi 0, %s28
      %s29 = sphi 0, %s26
      %s30 = sphi 0, %s29
      %s46 = sphi 0, %s30
      %s50 = sphi 0, %s50
      %s52 = sphi 0, %s50
      %s53 = sphi 0, %s52
      %s67 = sphi 0, %s53
      %s71 = sphi 0, %s71
      %s73 = sphi 0, %s71
      %s74 = sphi 0, %s73
      %s88 = sphi 0, %s74
      %s92 = sphi 0, %s92
      %s94 = sphi 0, %s92
      %s95 = sphi 0, %s94
      %s109 = sphi 0, %s95
      %s113 = sphi 0, %s113
      %s115 = sphi 0, %s113
      %s116 = sphi 0, %s115
      %s130 = sphi 0, %s116
      %s136 = sphi 0, %s138
      %s139 = sphi 0, %s136
      %s140 = sphi 0, %s139
      %s156 = sphi 0, %s140
    $region4: #{tpu_custom_call.1} parent=1 // loop_header_branch
      %19 = sbr.rel (%p17) target = $region8
    $region5: #{tpu_custom_call.1} parent=1 // loop_body
      %s21 = ssub.s32 %s16, 1
      %s22 = ssub.s32 %s16, 2
      %s23 = sadd.s32 %s16, 1
      %s24 = ssub.s32 %s16, %s23
      %p25 = scmp.eq.s32.totalorder %s24, 0
      %s27 = sadd.s32 %s26, 1
      %s28 = scalar_select %p25, %s26, %s27
      %p31 = pneg %p25
      %p32 = scmp.eq.s32.totalorder %s16, 1
      %p33 = por %p31, %p32
      %p34 = scmp.ne.s32.totalorder %s26, %s29
      %p35 = scmp.eq.s32.totalorder %s16, 0
      %p36 = por %p34, %p35
      %p37 = scmp.ne.s32.totalorder %s26, %s29
      %p38 = scmp.eq.s32.totalorder %s21, 1
      %p39 = por %p37, %p38
      %p40 = scmp.ne.s32.totalorder %s29, %s30
      %p41 = scmp.eq.s32.totalorder %s21, 0
      %p42 = por %p40, %p41
      %p43 = scmp.ne.s32.totalorder %s29, %s30
      %p44 = scmp.eq.s32.totalorder %s22, 1
      %p45 = por %p43, %p44
      %p47 = scmp.ne.s32.totalorder %s30, %s46
      %p48 = scmp.eq.s32.totalorder %s22, 0
      %p49 = por %p47, %p48
      %s51 = sadd.s32 %s50, 1
      %p54 = scmp.eq.s32.totalorder %s16, 1
      %p55 = scmp.ne.s32.totalorder %s50, %s52
      %p56 = scmp.eq.s32.totalorder %s16, 0
      %p57 = por %p55, %p56
      %p58 = scmp.ne.s32.totalorder %s50, %s52
      %p59 = scmp.eq.s32.totalorder %s21, 1
      %p60 = por %p58, %p59
      %p61 = scmp.ne.s32.totalorder %s52, %s53
      %p62 = scmp.eq.s32.totalorder %s21, 0
      %p63 = por %p61, %p62
      %p64 = scmp.ne.s32.totalorder %s52, %s53
      %p65 = scmp.eq.s32.totalorder %s22, 1
      %p66 = por %p64, %p65
      %p68 = scmp.ne.s32.totalorder %s53, %s67
      %p69 = scmp.eq.s32.totalorder %s22, 0
      %p70 = por %p68, %p69
      %s72 = sadd.s32 %s71, 1
      %p75 = scmp.eq.s32.totalorder %s16, 1
      %p76 = scmp.ne.s32.totalorder %s71, %s73
      %p77 = scmp.eq.s32.totalorder %s16, 0
      %p78 = por %p76, %p77
      %p79 = scmp.ne.s32.totalorder %s71, %s73
      %p80 = scmp.eq.s32.totalorder %s21, 1
      %p81 = por %p79, %p80
      %p82 = scmp.ne.s32.totalorder %s73, %s74
      %p83 = scmp.eq.s32.totalorder %s21, 0
      %p84 = por %p82, %p83
      %p85 = scmp.ne.s32.totalorder %s73, %s74
      %p86 = scmp.eq.s32.totalorder %s22, 1
      %p87 = por %p85, %p86
      %p89 = scmp.ne.s32.totalorder %s74, %s88
      %p90 = scmp.eq.s32.totalorder %s22, 0
      %p91 = por %p89, %p90
      %s93 = sadd.s32 %s92, 1
      %p96 = scmp.eq.s32.totalorder %s16, 1
      %p97 = scmp.ne.s32.totalorder %s92, %s94
      %p98 = scmp.eq.s32.totalorder %s16, 0
      %p99 = por %p97, %p98
      %p100 = scmp.ne.s32.totalorder %s92, %s94
      %p101 = scmp.eq.s32.totalorder %s21, 1
      %p102 = por %p100, %p101
      %p103 = scmp.ne.s32.totalorder %s94, %s95
      %p104 = scmp.eq.s32.totalorder %s21, 0
      %p105 = por %p103, %p104
      %p106 = scmp.ne.s32.totalorder %s94, %s95
      %p107 = scmp.eq.s32.totalorder %s22, 1
      %p108 = por %p106, %p107
      %p110 = scmp.ne.s32.totalorder %s95, %s109
      %p111 = scmp.eq.s32.totalorder %s22, 0
      %p112 = por %p110, %p111
      %s114 = sadd.s32 %s113, 1
      %p117 = scmp.eq.s32.totalorder %s16, 1
      %p118 = scmp.ne.s32.totalorder %s113, %s115
      %p119 = scmp.eq.s32.totalorder %s16, 0
      %p120 = por %p118, %p119
      %p121 = scmp.ne.s32.totalorder %s113, %s115
      %p122 = scmp.eq.s32.totalorder %s21, 1
      %p123 = por %p121, %p122
      %p124 = scmp.ne.s32.totalorder %s115, %s116
      %p125 = scmp.eq.s32.totalorder %s21, 0
      %p126 = por %p124, %p125
      %p127 = scmp.ne.s32.totalorder %s115, %s116
      %p128 = scmp.eq.s32.totalorder %s22, 1
      %p129 = por %p127, %p128
      %p131 = scmp.ne.s32.totalorder %s116, %s130
      %p132 = scmp.eq.s32.totalorder %s22, 0
      %p133 = por %p131, %p132
      %s134 = ssub.s32 %s16, %s23
      %p135 = scmp.eq.s32.totalorder %s134, 0
      %s137 = sadd.s32 %s136, 1
      %s138 = scalar_select %p135, %s136, %s137
      %p141 = pneg %p135
      %p142 = scmp.eq.s32.totalorder %s16, 1
      %p143 = por %p141, %p142
      %p144 = scmp.ne.s32.totalorder %s136, %s139
      %p145 = scmp.eq.s32.totalorder %s16, 0
      %p146 = por %p144, %p145
      %p147 = scmp.ne.s32.totalorder %s136, %s139
      %p148 = scmp.eq.s32.totalorder %s21, 1
      %p149 = por %p147, %p148
      %p150 = scmp.ne.s32.totalorder %s139, %s140
      %p151 = scmp.eq.s32.totalorder %s21, 0
      %p152 = por %p150, %p151
      %p153 = scmp.ne.s32.totalorder %s139, %s140
      %p154 = scmp.eq.s32.totalorder %s22, 1
      %p155 = por %p153, %p154
      %p157 = scmp.ne.s32.totalorder %s140, %s156
      %p158 = scmp.eq.s32.totalorder %s22, 0
      %p159 = por %p157, %p158
      %p160 = scmp.le.s32.totalorder 1, %s16
      %p161 = scmp.lt.s32.totalorder %s16, 3
      %p162 = pnand %p160, %p161
      %p163 = pneg %p162
      // Predicated region
      $region9: #{tpu_custom_call.1} parent=5 // pred_check
        _
      $region10: #{tpu_custom_call.1} parent=5 // pred_check_branch
        %165 = sbr.rel (%p162) target = $region12
      $region11: #{tpu_custom_call.1} parent=5 // pred_region
        %s166 = ssub.s32 %s16, 1
        // Predicated region
        $region13: #{tpu_custom_call.1} parent=11 // pred_check
          %p167 = pneg %p63
        $region14: #{tpu_custom_call.1} parent=11 // pred_check_branch
          %169 = sbr.rel (%p167) target = $region16
        $region15: #{tpu_custom_call.1} parent=11 // pred_region
          %171 = vsyncadd [#allocation3], 0
          %s173 = sshll.u32 %s1, 4
          %s174 = int_to_ptr.hbm [resolvable:$true] %s173
          %s175 = sshll.u32 [#allocation2], 4
          %s176 = int_to_ptr.vmem [resolvable:$true] %s175
          %178 = dma.hbm_to_vmem [thread:$0]  %s174, 128, %s176, [#allocation3]
        $region16: #{tpu_custom_call.1} parent=11 // pred_fallthru
          _
        // Predicated region
        $region17: #{tpu_custom_call.1} parent=11 // pred_check
          %p179 = pneg %p84
        $region18: #{tpu_custom_call.1} parent=11 // pred_check_branch
          %181 = sbr.rel (%p179) target = $region20
        $region19: #{tpu_custom_call.1} parent=11 // pred_region
          _
        $region20: #{tpu_custom_call.1} parent=11 // pred_fallthru
          _
        // Predicated region
        $region21: #{tpu_custom_call.1} parent=11 // pred_check
          %p182 = pneg %p105
        $region22: #{tpu_custom_call.1} parent=11 // pred_check_branch
          %184 = sbr.rel (%p182) target = $region24
        $region23: #{tpu_custom_call.1} parent=11 // pred_region
          %186 = vsyncadd [#allocation6], 0
          %s188 = sshll.u32 %s3, 4
          %s189 = int_to_ptr.hbm [resolvable:$true] %s188
          %s190 = sshll.u32 [#allocation5], 4
          %s191 = int_to_ptr.vmem [resolvable:$true] %s190
          %193 = dma.hbm_to_vmem [thread:$0]  %s189, 128, %s191, [#allocation6]
        $region24: #{tpu_custom_call.1} parent=11 // pred_fallthru
          _
        // Predicated region
        $region25: #{tpu_custom_call.1} parent=11 // pred_check
          %p194 = pneg %p126
        $region26: #{tpu_custom_call.1} parent=11 // pred_check_branch
          %196 = sbr.rel (%p194) target = $region28
        $region27: #{tpu_custom_call.1} parent=11 // pred_region
          _
        $region28: #{tpu_custom_call.1} parent=11 // pred_fallthru
          _
      $region12: #{tpu_custom_call.1} parent=5 // pred_fallthru
        _
      %p197 = scmp.lt.s32.totalorder %s16, 2
      // Predicated region
      $region29: #{tpu_custom_call.1} parent=5 // pred_check
        %p198 = pneg %p197
      $region30: #{tpu_custom_call.1} parent=5 // pred_check_branch
        %200 = sbr.rel (%p198) target = $region32
      $region31: #{tpu_custom_call.1} parent=5 // pred_region
        // Predicated region
        $region33: #{tpu_custom_call.1} parent=31 // pred_check
          %p201 = pneg %p36
        $region34: #{tpu_custom_call.1} parent=31 // pred_check_branch
          %203 = sbr.rel (%p201) target = $region36
        $region35: #{tpu_custom_call.1} parent=31 // pred_region
          %p204 = scmp.lt.s32.totalorder %s16, 1
          %s205 = scalar_select %p204, %s16, 1
          %s206 = smul.addr %s205, 2
          %s207 = smul.addr %s206, 4
          %s208 = scalar_lea.vmem %s0, %s207
        $region36: #{tpu_custom_call.1} parent=31 // pred_fallthru
          _
      $region32: #{tpu_custom_call.1} parent=5 // pred_fallthru
        _
      %p209 = scmp.le.s32.totalorder 1, %s16
      %p210 = scmp.lt.s32.totalorder %s16, 3
      %p211 = pnand %p209, %p210
      %p212 = pneg %p211
      // Predicated region
      $region37: #{tpu_custom_call.1} parent=5 // pred_check
        _
      $region38: #{tpu_custom_call.1} parent=5 // pred_check_branch
        %214 = sbr.rel (%p211) target = $region40
      $region39: #{tpu_custom_call.1} parent=5 // pred_region
        %s215 = ssub.s32 %s16, 1
        // Predicated region
        $region41: #{tpu_custom_call.1} parent=39 // pred_check
          %p216 = pneg %p63
        $region42: #{tpu_custom_call.1} parent=39 // pred_check_branch
          %218 = sbr.rel (%p216) target = $region44
        $region43: #{tpu_custom_call.1} parent=39 // pred_region
          %220 = dma.done [#allocation3], 128
        $region44: #{tpu_custom_call.1} parent=39 // pred_fallthru
          _
        // Predicated region
        $region45: #{tpu_custom_call.1} parent=39 // pred_check
          %p221 = pneg %p105
        $region46: #{tpu_custom_call.1} parent=39 // pred_check_branch
          %223 = sbr.rel (%p221) target = $region48
        $region47: #{tpu_custom_call.1} parent=39 // pred_region
          %225 = dma.done [#allocation6], 128
        $region48: #{tpu_custom_call.1} parent=39 // pred_fallthru
          _
        %p226 = scmp.lt.s32.totalorder %s21, 1
        %s227 = scalar_select %p226, %s21, 1
        %s228 = smul.addr %s227, 2
        %s229 = smul.addr %s228, 4
        %s230 = scalar_lea.vmem %s0, %s229
        %p231 = pneg %p42
        %p232 = pneg %p39
        %p233 = pneg %p63
        %p234 = pneg %p60
        %p235 = pneg %p84
        %p236 = pneg %p81
        %p237 = pneg %p105
        %p238 = pneg %p102
        %p239 = pneg %p126
        %p240 = pneg %p123
        %p241 = pneg %p152
        %p242 = pneg %p149
        %s243 = sand.u32 %s139, 1
        %s244 = scalar_lea.sflag [#allocation4], %s243
        %s245 = sand.u32 %s139, 1
        %s246 = smul.addr %s245, 16
        %s247 = scalar_lea.vmem [#allocation7], %s246
        %p248 = scmp.lt.s32.totalorder %s21, 1
        %s249 = scalar_select %p248, %s21, 1
        %s250 = smul.addr %s249, 2
        %s251 = smul.addr %s250, 4
        %s252 = scalar_lea.vmem %s0, %s251
        %v253 = vld [vmem:[%s252] sm:$0xff]
        %255 = vst [vmem:[#allocation1] ss:$2 sm:$0xff] %v253
        %v256 = vld.sshfl [vmem:[#allocation1] sm:$0xff pattern:$0x75316420]
        %v257 = vld.sshfl [vmem:[#allocation1 + $0x8] sm:$0xff pattern:$0x75316420]
        %s260 = scalar_lea.vmem [#allocation1], 1
        %261 = vst [vmem:[%s260] ss:$2 sm:$0xff] %v253
        %v262 = vld.sshfl [vmem:[#allocation1] sm:$0xff pattern:$0x75316420]
        %v263 = vld.sshfl [vmem:[#allocation1 + $0x8] sm:$0xff pattern:$0x75316420]
        %264 = vrot.lane.b32.xlu0 %v262, 127
        %v265 = vpop.permute.xlu0 %264
        %266 = vrot.lane.b32.xlu0 %v263, 127
        %v267 = vpop.permute.xlu0 %266
        %vm268 = vcmask 1039360
        %v269 = vsel %vm268, %v265, %v267
        %272 = vst [vmem:[#allocation1] ss:$2 sm:$0xff] %v253
        %v273 = vld.sshfl [vmem:[#allocation1] sm:$0xff pattern:$0x75316420]
        %v274 = vld.sshfl [vmem:[#allocation1 + $0x8] sm:$0xff pattern:$0x75316420]
        %275 = vrot.lane.b32.xlu0 %v273, 126
        %v276 = vpop.permute.xlu0 %275
        %277 = vrot.lane.b32.xlu0 %v274, 126
        %v278 = vpop.permute.xlu0 %277
        %vm279 = vcmask 1031168
        %v280 = vsel %vm279, %v276, %v278
        %s283 = scalar_lea.vmem [#allocation1], 1
        %284 = vst [vmem:[%s283] ss:$2 sm:$0xff] %v253
        %v285 = vld.sshfl [vmem:[#allocation1] sm:$0xff pattern:$0x75316420]
        %v286 = vld.sshfl [vmem:[#allocation1 + $0x8] sm:$0xff pattern:$0x75316420]
        %287 = vrot.lane.b32.xlu0 %v285, 112
        %v288 = vpop.permute.xlu0 %287
        %289 = vrot.lane.b32.xlu0 %v286, 112
        %v290 = vpop.permute.xlu0 %289
        %vm291 = vcmask 916480
        %v292 = vsel %vm291, %v288, %v290
        %295 = vst [vmem:[#allocation1] ss:$2 sm:$0xff] %v253
        %v296 = vld.sshfl [vmem:[#allocation1] sm:$0xff pattern:$0x75316420]
        %v297 = vld.sshfl [vmem:[#allocation1 + $0x8] sm:$0xff pattern:$0x75316420]
        %298 = vrot.lane.b32.xlu0 %v296, 111
        %v299 = vpop.permute.xlu0 %298
        %300 = vrot.lane.b32.xlu0 %v297, 111
        %v301 = vpop.permute.xlu0 %300
        %vm302 = vcmask 908288
        %v303 = vsel %vm302, %v299, %v301
        %s306 = scalar_lea.vmem [#allocation1], 1
        %307 = vst [vmem:[%s306] ss:$2 sm:$0xff] %v253
        %v308 = vld.sshfl [vmem:[#allocation1] sm:$0xff pattern:$0x75316420]
        %v309 = vld.sshfl [vmem:[#allocation1 + $0x8] sm:$0xff pattern:$0x75316420]
        %310 = vrot.lane.b32.xlu0 %v308, 110
        %v311 = vpop.permute.xlu0 %310
        %312 = vrot.lane.b32.xlu0 %v309, 110
        %v313 = vpop.permute.xlu0 %312
        %vm314 = vcmask 900096
        %v315 = vsel %vm314, %v311, %v313
        %318 = vst [vmem:[#allocation1] ss:$2 sm:$0xff] %v253
        %v319 = vld.sshfl [vmem:[#allocation1] sm:$0xff pattern:$0x75316420]
        %v320 = vld.sshfl [vmem:[#allocation1 + $0x8] sm:$0xff pattern:$0x75316420]
        %321 = vrot.lane.b32.xlu0 %v319, 96
        %v322 = vpop.permute.xlu0 %321
        %323 = vrot.lane.b32.xlu0 %v320, 96
        %v324 = vpop.permute.xlu0 %323
        %vm325 = vcmask 785408
        %v326 = vsel %vm325, %v322, %v324
        %s329 = scalar_lea.vmem [#allocation1], 1
        %330 = vst [vmem:[%s329] ss:$2 sm:$0xff] %v253
        %v331 = vld.sshfl [vmem:[#allocation1] sm:$0xff pattern:$0x75316420]
        %v332 = vld.sshfl [vmem:[#allocation1 + $0x8] sm:$0xff pattern:$0x75316420]
        %333 = vrot.lane.b32.xlu0 %v331, 95
        %v334 = vpop.permute.xlu0 %333
        %335 = vrot.lane.b32.xlu0 %v332, 95
        %v336 = vpop.permute.xlu0 %335
        %vm337 = vcmask 777216
        %v338 = vsel %vm337, %v334, %v336
        %341 = vst [vmem:[#allocation1] ss:$2 sm:$0xff] %v253
        %v342 = vld.sshfl [vmem:[#allocation1] sm:$0xff pattern:$0x75316420]
        %v343 = vld.sshfl [vmem:[#allocation1 + $0x8] sm:$0xff pattern:$0x75316420]
        %344 = vrot.lane.b32.xlu0 %v342, 94
        %v345 = vpop.permute.xlu0 %344
        %346 = vrot.lane.b32.xlu0 %v343, 94
        %v347 = vpop.permute.xlu0 %346
        %vm348 = vcmask 769024
        %v349 = vsel %vm348, %v345, %v347
        %vm350 = vcmask 1043456
        %v351 = vsel %vm350, %v256, %v269
        %v352 = vsel %vm350, %v257, %v267
        %v353 = vsel %vm350, %v280, %v292
        %v354 = vsel %vm350, %v278, %v290
        %v355 = vsel %vm350, %v303, %v315
        %v356 = vsel %vm350, %v301, %v313
        %v357 = vsel %vm350, %v326, %v338
        %v358 = vsel %vm350, %v324, %v336
        %v359 = vld [vmem:[#allocation2] sm:$0xff]
        %v360 = vld [vmem:[%s2] sm:$0xff]
        %362 = vset.pattern.permute.xlu0 0
        %363 = vperm.xlu0 %362, %v360
        %v364 = vpop.permute.xlu0 %363
        %vm366 = vcmask 293888
        %v368 = vsel %vm366, %v359, 0
        %v370 = vsel %vm350, %v349, 0
        %v372 = vsel %vm350, %v347, 0
        %374 = vmatpush.msra.mxu0 0.0
        %375 = vmatpush.msra.mxu0 0.0
        %376 = vmatpush.msra.mxu0 0.0
        %377 = vmatpush.msra.mxu0 0.0
        %378 = vmatpush.msra.mxu0 0.0
        %379 = vmatpush.msra.mxu0 0.0
        %380 = vmatpush.msra.mxu0 0.0
        %381 = vmatpush.msra.mxu0 0.0
        %382 = vmatpush.msra.mxu0 0.0
        %383 = vmatpush.msra.mxu0 0.0
        %384 = vmatpush.msra.mxu0 0.0
        %385 = vmatpush.msra.mxu0 %v370
        %386 = vmatpush.msra.mxu0 %v357
        %387 = vmatpush.msra.mxu0 %v355
        %388 = vmatpush.msra.mxu0 %v353
        %389 = vmatpush.msra.mxu0 %v351
        %390 = vmatmul.f32.gmra.mxu0 %v368
        %v391 = vpop.f32.mrf.mxu0
        %v392 = vadd.f32 %v364, %v391
        %393 = vdwg.mxu0
        %394 = vmatpush.msra.mxu0 0.0
        %395 = vmatpush.msra.mxu0 0.0
        %396 = vmatpush.msra.mxu0 0.0
        %397 = vmatpush.msra.mxu0 0.0
        %398 = vmatpush.msra.mxu0 0.0
        %399 = vmatpush.msra.mxu0 0.0
        %400 = vmatpush.msra.mxu0 0.0
        %401 = vmatpush.msra.mxu0 0.0
        %402 = vmatpush.msra.mxu0 0.0
        %403 = vmatpush.msra.mxu0 0.0
        %404 = vmatpush.msra.mxu0 0.0
        %405 = vmatpush.msra.mxu0 %v372
        %406 = vmatpush.msra.mxu0 %v358
        %407 = vmatpush.msra.mxu0 %v356
        %408 = vmatpush.msra.mxu0 %v354
        %409 = vmatpush.msra.mxu0 %v352
        %410 = vmatmul.f32.gmra.mxu0 %v368
        %v411 = vpop.f32.mrf.mxu0
        %v412 = vadd.f32 %v364, %v411
        %413 = vdwg.mxu0
        %v414 = vmax.f32 %v392, 0.0
        %v415 = vmax.f32 %v412, 0.0
        %418 = vrot.lane.b32.xlu0 %v414, 127
        %v419 = vpop.permute.xlu0 %418
        %420 = vrot.lane.b32.xlu0 %v415, 127
        %v421 = vpop.permute.xlu0 %420
        %v422 = vsel %vm268, %v419, %v421
        %425 = vrot.lane.b32.xlu0 %v414, 126
        %v426 = vpop.permute.xlu0 %425
        %427 = vrot.lane.b32.xlu0 %v415, 126
        %v428 = vpop.permute.xlu0 %427
        %v429 = vsel %vm279, %v426, %v428
        %432 = vrot.lane.b32.xlu0 %v414, 112
        %v433 = vpop.permute.xlu0 %432
        %434 = vrot.lane.b32.xlu0 %v415, 112
        %v435 = vpop.permute.xlu0 %434
        %v436 = vsel %vm291, %v433, %v435
        %439 = vrot.lane.b32.xlu0 %v414, 111
        %v440 = vpop.permute.xlu0 %439
        %441 = vrot.lane.b32.xlu0 %v415, 111
        %v442 = vpop.permute.xlu0 %441
        %v443 = vsel %vm302, %v440, %v442
        %446 = vrot.lane.b32.xlu0 %v414, 110
        %v447 = vpop.permute.xlu0 %446
        %448 = vrot.lane.b32.xlu0 %v415, 110
        %v449 = vpop.permute.xlu0 %448
        %v450 = vsel %vm314, %v447, %v449
        %453 = vrot.lane.b32.xlu0 %v414, 96
        %v454 = vpop.permute.xlu0 %453
        %455 = vrot.lane.b32.xlu0 %v415, 96
        %v456 = vpop.permute.xlu0 %455
        %v457 = vsel %vm325, %v454, %v456
        %460 = vrot.lane.b32.xlu0 %v414, 95
        %v461 = vpop.permute.xlu0 %460
        %462 = vrot.lane.b32.xlu0 %v415, 95
        %v463 = vpop.permute.xlu0 %462
        %v464 = vsel %vm337, %v461, %v463
        %467 = vrot.lane.b32.xlu0 %v414, 94
        %v468 = vpop.permute.xlu0 %467
        %469 = vrot.lane.b32.xlu0 %v415, 94
        %v470 = vpop.permute.xlu0 %469
        %v471 = vsel %vm348, %v468, %v470
        %v474 = vld [vmem:[#allocation5] sm:$0xff]
        %v475 = vld [vmem:[%s4] sm:$0xff]
        %477 = vset.pattern.permute.xlu0 0
        %478 = vperm.xlu0 %477, %v475
        %v479 = vpop.permute.xlu0 %478
        %vm481 = vcmask 588800
        %v483 = vsel %vm481, %v474, 0
        %485 = vmatpush.msra.mxu0 0.0
        %486 = vmatpush.msra.mxu0 0.0
        %487 = vmatpush.msra.mxu0 0.0
        %488 = vmatpush.msra.mxu0 0.0
        %489 = vmatpush.msra.mxu0 0.0
        %490 = vmatpush.msra.mxu0 0.0
        %491 = vmatpush.msra.mxu0 0.0
        %492 = vmatpush.msra.mxu0 %v471
        %493 = vmatpush.msra.mxu0 %v464
        %494 = vmatpush.msra.mxu0 %v457
        %495 = vmatpush.msra.mxu0 %v450
        %496 = vmatpush.msra.mxu0 %v443
        %497 = vmatpush.msra.mxu0 %v436
        %498 = vmatpush.msra.mxu0 %v429
        %499 = vmatpush.msra.mxu0 %v422
        %500 = vmatpush.msra.mxu0 %v414
        %501 = vmatmul.f32.gmra.mxu0 %v483
        %v502 = vpop.f32.mrf.mxu0
        %v503 = vadd.f32 %v479, %v502
        %504 = vdwg.mxu0
        %505 = vmatpush.msra.mxu0 0.0
        %506 = vmatpush.msra.mxu0 0.0
        %507 = vmatpush.msra.mxu0 0.0
        %508 = vmatpush.msra.mxu0 0.0
        %509 = vmatpush.msra.mxu0 0.0
        %510 = vmatpush.msra.mxu0 0.0
        %511 = vmatpush.msra.mxu0 0.0
        %512 = vmatpush.msra.mxu0 %v470
        %513 = vmatpush.msra.mxu0 %v463
        %514 = vmatpush.msra.mxu0 %v456
        %515 = vmatpush.msra.mxu0 %v449
        %516 = vmatpush.msra.mxu0 %v442
        %517 = vmatpush.msra.mxu0 %v435
        %518 = vmatpush.msra.mxu0 %v428
        %519 = vmatpush.msra.mxu0 %v421
        %520 = vmatpush.msra.mxu0 %v415
        %521 = vmatmul.f32.gmra.mxu0 %v483
        %v522 = vpop.f32.mrf.mxu0
        %v523 = vadd.f32 %v479, %v522
        %524 = vdwg.mxu0
        %526 = vrot.lane.b32.xlu0 %v503, 124
        %v527 = vpop.permute.xlu0 %526
        %529 = vrot.lane.b32.xlu0 %v503, 120
        %v530 = vpop.permute.xlu0 %529
        %532 = vrot.lane.b32.xlu0 %v503, 116
        %v533 = vpop.permute.xlu0 %532
        %535 = vrot.lane.b32.xlu0 %v503, 112
        %v536 = vpop.permute.xlu0 %535
        %538 = vrot.lane.b32.xlu0 %v503, 108
        %v539 = vpop.permute.xlu0 %538
        %541 = vrot.lane.b32.xlu0 %v503, 104
        %v542 = vpop.permute.xlu0 %541
        %544 = vrot.lane.b32.xlu0 %v503, 100
        %v545 = vpop.permute.xlu0 %544
        %548 = vrot.lane.b32.xlu0 %v523, 96
        %v549 = vpop.permute.xlu0 %548
        %551 = vrot.lane.b32.xlu0 %v523, 92
        %v552 = vpop.permute.xlu0 %551
        %554 = vrot.lane.b32.xlu0 %v523, 88
        %v555 = vpop.permute.xlu0 %554
        %557 = vrot.lane.b32.xlu0 %v523, 84
        %v558 = vpop.permute.xlu0 %557
        %vm560 = vcmask 97280
        %v561 = vsel %vm560, %v503, %v527
        %vm562 = vcmask 195584
        %v563 = vsel %vm562, %v561, %v530
        %v564 = vsel %vm366, %v563, %v533
        %vm565 = vcmask 392192
        %v566 = vsel %vm565, %v564, %v536
        %vm567 = vcmask 490496
        %v568 = vsel %vm567, %v566, %v539
        %v569 = vsel %vm481, %v568, %v542
        %vm570 = vcmask 687104
        %v571 = vsel %vm570, %v569, %v545
        %v572 = vsel %vm325, %v571, %v549
        %vm573 = vcmask 883712
        %v574 = vsel %vm573, %v572, %v552
        %vm575 = vcmask 982016
        %v576 = vsel %vm575, %v574, %v555
        %vm577 = vcmask 31744
        %v578 = vsel %vm577, %v555, %v558
        %579 = vst [vmem:[%s247] sm:$0xff] %v576
        %vm580 = vcmask 130048
        %581 = vst.msk [vmem:[%s247 + $0x8] sm:$0xff] %vm580, %v578
        %s582 = sand.u32 %s139, 1
        %s583 = scalar_lea.sflag [#allocation4], %s582
        %s584 = sand.u32 %s139, 1
        %s585 = smul.addr %s584, 16
        %s586 = scalar_lea.vmem [#allocation7], %s585
        // Predicated region
        $region49: #{tpu_custom_call.1} parent=39 // pred_check
          %p587 = pneg %p149
        $region50: #{tpu_custom_call.1} parent=39 // pred_check_branch
          %589 = sbr.rel (%p587) target = $region52
        $region51: #{tpu_custom_call.1} parent=39 // pred_region
          %591 = vsyncadd %s583, 0
          %s592 = smul.addr %s21, 2
          %s593 = smul.addr %s592, 8
          %s594 = scalar_lea.hbm %s5, %s593
          %s596 = sshll.u32 %s586, 4
          %s597 = int_to_ptr.vmem [resolvable:$true] %s596
          %s598 = sshll.u32 %s594, 4
          %s599 = int_to_ptr.hbm [resolvable:$true] %s598
          %601 = dma.vmem_to_hbm [thread:$0]  %s597, 256, %s599, %s583
        $region52: #{tpu_custom_call.1} parent=39 // pred_fallthru
          _
      $region40: #{tpu_custom_call.1} parent=5 // pred_fallthru
        _
      %p602 = scmp.le.s32.totalorder 2, %s16
      // Predicated region
      $region53: #{tpu_custom_call.1} parent=5 // pred_check
        %p603 = pneg %p602
      $region54: #{tpu_custom_call.1} parent=5 // pred_check_branch
        %605 = sbr.rel (%p603) target = $region56
      $region55: #{tpu_custom_call.1} parent=5 // pred_region
        %s606 = ssub.s32 %s16, 2
        // Predicated region
        $region57: #{tpu_custom_call.1} parent=55 // pred_check
          %p607 = pneg %p155
        $region58: #{tpu_custom_call.1} parent=55 // pred_check_branch
          %609 = sbr.rel (%p607) target = $region60
        $region59: #{tpu_custom_call.1} parent=55 // pred_region
          %s610 = sand.u32 %s140, 1
          %s611 = scalar_lea.sflag [#allocation4], %s610
          %s612 = sand.u32 %s140, 1
          %s613 = smul.addr %s612, 16
          %s614 = scalar_lea.vmem [#allocation7], %s613
          %616 = dma.done %s611, 256
        $region60: #{tpu_custom_call.1} parent=55 // pred_fallthru
          _
      $region56: #{tpu_custom_call.1} parent=5 // pred_fallthru
        _
    $region6: #{tpu_custom_call.1} parent=1 // loop_footer
      %s20 = sadd.s32 1, %s16
    $region7: #{tpu_custom_call.1} parent=1 // loop_footer_branch
      %15 = sbr.rel target = $region3
    $region8: #{tpu_custom_call.1} parent=1 // loop_exit
      _
    %617 = vsyncpa [#allocation3], 1
    %s618 = scalar_lea.sflag [#allocation3], 1
    %619 = vsyncpa %s618, 1
    %620 = vsyncpa [#allocation6], 1
    %621 = vsyncpa [#allocation4], 1
    %s622 = scalar_lea.sflag [#allocation4], 1
    %623 = vsyncpa %s622, 1

</llo_original>
